<compile_context>
chip_gen: v5e
topology: v5e:2x2
jax: 0.10.0
libtpu: 0.0.40
codegen_flags: <defaults>
</compile_context>

<pallas_src>
import numpy as np
import jax
import jax.numpy as jnp
from jax.experimental import pallas as pl
from jax.experimental.pallas import tpu as pltpu


# --------------------------------------------------------------------------
# Deterministic "generate_wavelet(frame=1)": piecewise-linear B-spline framelet
# --------------------------------------------------------------------------
def generate_wavelet(frame=1):
    assert frame == 1
    d1 = np.array([1.0, 2.0, 1.0], np.float64) / 4.0
    d2 = np.array([1.0, 0.0, -1.0], np.float64) * np.sqrt(2.0) / 4.0
    d3 = np.array([-1.0, 2.0, -1.0], np.float64) / 4.0
    oned = [d1, d2, d3]
    dec2d = [np.outer(a, b).astype(np.float32) for a in oned for b in oned]
    rec2d = [f.copy() for f in dec2d]
    return dec2d, rec2d


def psf2otf(psf, shape):
    """OTF of a small filter for circular convolution on `shape` (complex64)."""
    H, W = shape
    psf = jnp.asarray(psf, jnp.float32)
    kh, kw = psf.shape
    pad = jnp.zeros((H, W), jnp.float32).at[:kh, :kw].set(psf)
    pad = jnp.roll(pad, shift=(-(kh // 2), -(kw // 2)), axis=(0, 1))
    return jnp.fft.fft2(pad)


def Fwv(dec2d, shape):
    return jnp.stack([psf2otf(f, shape) for f in dec2d], axis=0)  # (C, H, W) complex


# --------------------------------------------------------------------------
# Pallas kernels: frequency-domain E-step combine
# --------------------------------------------------------------------------
def _e_step_x_kernel_noz(beta_ref,                     # SMEM  (B, C)  scalar prefetch
                         yr_ref, yi_ref,               # VMEM  (1, TR, L)
                         kr_ref, ki_ref,               # VMEM  (1, TR, L)
                         fw2_ref,                      # VMEM  (C, TR, L)  = |Fw|^2
                         out_ref):                     # VMEM  (1, 2, TR, L)
    b = pl.program_id(1)
    yr, yi = yr_ref[0], yi_ref[0]
    kr, ki = kr_ref[0], ki_ref[0]

    # S_b = sum_c beta[b, c] * |Fw_c|^2   (unrolled: C FMAs per pixel)
    C = fw2_ref.shape[0]
    s = beta_ref[b, 0] * fw2_ref[0]
    for c in range(1, C):
        s = s + beta_ref[b, c] * fw2_ref[c]

    # Fden is purely real -> single real reciprocal.
    den = kr * kr + ki * ki + s
    inv = pl.reciprocal(den, approx=False)

    # Fnum = conj(Fker) * Fy   (the |Fw|^2*Fz term is zero when z is None)
    out_ref[0, 0] = (kr * yr + ki * yi) * inv
    out_ref[0, 1] = (kr * yi - ki * yr) * inv


def _e_step_x_kernel_z(beta_ref,
                       yr_ref, yi_ref,
                       zr_ref, zi_ref,
                       kr_ref, ki_ref,
                       fw2_ref,
                       out_ref):
    b = pl.program_id(1)
    yr, yi = yr_ref[0], yi_ref[0]
    zr, zi = zr_ref[0], zi_ref[0]
    kr, ki = kr_ref[0], ki_ref[0]

    C = fw2_ref.shape[0]
    s = beta_ref[b, 0] * fw2_ref[0]
    for c in range(1, C):
        s = s + beta_ref[b, c] * fw2_ref[c]

    den = kr * kr + ki * ki + s
    inv = pl.reciprocal(den, approx=False)

    # Fnum = conj(Fker)*Fy + S_b * Fz    (since conj(Fw)*(Fw*Fz) = |Fw|^2*Fz)
    out_ref[0, 0] = (kr * yr + ki * yi + s * zr) * inv
    out_ref[0, 1] = (kr * yi - ki * yr + s * zi) * inv


def _spatial_layout(H, W, max_rows=512):
    """Flatten (H, W) to a lane-dense (R, L) plane and pick a row tile TR."""
    N = H * W
    if N % 128 != 0:
        # Fallback for odd sizes: keep native layout, full-extent blocks.
        return H, W, H
    L = 128
    R = N // 128
    TR = R
    if R > max_rows and R % 8 == 0:
        for cand in range(max_rows - (max_rows % 8), 7, -8):
            if R % cand == 0:
                TR = cand
                break
    return R, L, TR


def e_step_x_pallas(beta, Fy, Fker, Fw2, Fz=None, max_rows=512):
    """beta: (B, C) f32; Fy/Fker[/Fz]: (B, H, W) complex; Fw2: (C, H, W) f32 = |Fw|^2."""
    B, H, W = Fy.shape
    C = Fw2.shape[0]
    R, L, TR = _spatial_layout(H, W, max_rows=max_rows)
    num_rt = R // TR

    f32 = lambda x: jnp.asarray(x, jnp.float32).reshape(B, R, L)
    planes = [f32(Fy.real), f32(Fy.imag)]
    if Fz is not None:
        planes += [f32(Fz.real), f32(Fz.imag)]
    planes += [f32(Fker.real), f32(Fker.imag)]
    fw2 = jnp.asarray(Fw2, jnp.float32).reshape(C, R, L)

    # Grid = (row tiles, batch). The |Fw|^2 block index does not change across
    # the inner batch loop, so Pallas keeps it resident instead of re-DMAing.
    bspec = pl.BlockSpec((1, TR, L), lambda r, b, beta_ref: (b, r, 0))
    wspec = pl.BlockSpec((C, TR, L), lambda r, b, beta_ref: (0, r, 0))
    ospec = pl.BlockSpec((1, 2, TR, L), lambda r, b, beta_ref: (b, 0, r, 0))

    kernel = _e_step_x_kernel_z if Fz is not None else _e_step_x_kernel_noz

    out = pl.pallas_call(
        kernel,
        out_shape=jax.ShapeDtypeStruct((B, 2, R, L), jnp.float32),
        grid_spec=pltpu.PrefetchScalarGridSpec(
            num_scalar_prefetch=1,                 # beta -> SMEM
            grid=(num_rt, B),
            in_specs=[bspec] * len(planes) + [wspec],
            out_specs=ospec,
        ),
        compiler_params=pltpu.CompilerParams(
            dimension_semantics=("parallel", "parallel")),
    )(jnp.asarray(beta, jnp.float32), *planes, fw2)

    Fx = (out[:, 0] + 1j * out[:, 1]).reshape(B, H, W)
    return Fx


# --------------------------------------------------------------------------
# Module wrapper mirroring E_step_x.forward
# --------------------------------------------------------------------------
class EStepX:
    def __init__(self, beta):
        self.dec2d, _ = generate_wavelet(frame=1)
        self.chn_num = len(self.dec2d)
        self.beta = jnp.asarray(beta, jnp.float32)           # (chn_num,)

    def __call__(self, y, Fker, beta=None, z=None):
        # y: (B, 1, H, W) float32 (NCHW); Fker: (B, H, W) complex64
        B = y.shape[0]
        H, W = y.shape[-2], y.shape[-1]
        if beta is None:
            beta = jnp.tile(self.beta[None, :], (B, 1))       # (B, C)
        else:
            beta = jnp.reshape(jnp.asarray(beta, jnp.float32), (B, self.chn_num))

        Fw = Fwv(self.dec2d, (H, W))                          # (C, H, W) complex
        Fw2 = (jnp.real(Fw) ** 2 + jnp.imag(Fw) ** 2).astype(jnp.float32)

        # TODO(synk): FFT/IFFT have no Pallas TPU primitive; done with jnp.fft as glue.
        Fy = jnp.fft.fft2(y[:, 0, :, :])
        # z=None default path: Fz would be FFT of zeros -> the wavelet numerator
        # term vanishes, so we skip streaming Fz entirely (kernel specialisation).
        Fz = None if z is None else jnp.fft.fft2(z[:, 0, :, :])

        Fx = e_step_x_pallas(beta, Fy, Fker, Fw2, Fz=Fz)      # (B, H, W) complex
        xhat = jnp.real(jnp.fft.ifft2(Fx)).astype(y.dtype)    # cf.ifft -> real
        return xhat[:, None, :, :]                            # (B, 1, H, W)


# --------------------------------------------------------------------------
# Pure-JAX reference for correctness checks
# --------------------------------------------------------------------------
def ref_forward(y, Fker, beta, dec2d, z=None):
    B, _, H, W = y.shape
    Fw = Fwv(dec2d, (H, W))
    if z is None:
        z = jnp.zeros_like(y)
    outs = []
    for i in range(B):
        Fy = jnp.fft.fft2(y[i, 0])
        Fz = jnp.fft.fft2(z[i, 0])
        b = beta[i][:, None, None]
        num = jnp.conj(Fker[i]) * Fy + jnp.sum(b * jnp.conj(Fw) * (Fw * Fz), axis=0)
        den = jnp.abs(Fker[i]) ** 2 + jnp.sum(b * (jnp.abs(Fw) ** 2), axis=0)
        outs.append(jnp.real(jnp.fft.ifft2(num / den)))
    return jnp.stack(outs)[:, None]


if __name__ == "__main__":
    key = jax.random.PRNGKey(0)
    k1, k2, k3 = jax.random.split(key, 3)
    B, H, W = 2, 16, 16

    y = jax.random.normal(k1, (B, 1, H, W), jnp.float32)

    # Deterministic per-image blur kernels -> their OTFs (this is the `Fker` input).
    g = np.exp(-((np.arange(5) - 2.0) ** 2) / 2.0)
    g2 = np.outer(g, g)
    kers = []
    for i in range(B):
        gi = g2 ** (i + 1)
        kers.append((gi / gi.sum()).astype(np.float32))
    Fker = jnp.stack([psf2otf(k, (H, W)) for k in kers], axis=0)    # (B, H, W) complex

    dec2d_tmp, _ = generate_wavelet(frame=1)
    C = len(dec2d_tmp)
    beta_param = 0.05 * (1.0 + np.arange(C, dtype=np.float32))
    beta_bc = jnp.tile(jnp.asarray(beta_param)[None, :], (B, 1))

    model = EStepX(beta=beta_param)

    # ---- check 1: default path (z=None, specialised kernel) ----
    xhat = jax.block_until_ready(model(y, Fker))
    ref = jax.block_until_ready(ref_forward(y, Fker, beta_bc, dec2d_tmp))
    assert xhat.shape == (B, 1, H, W)
    np.testing.assert_allclose(np.asarray(xhat), np.asarray(ref), rtol=1e-3, atol=1e-4)

    # ---- check 2: explicit z path (general kernel) ----
    z = 0.5 * jax.random.normal(k2, (B, 1, H, W), jnp.float32)
    xhat_z = jax.block_until_ready(model(y, Fker, z=z))
    ref_z = jax.block_until_ready(ref_forward(y, Fker, beta_bc, dec2d_tmp, z=z))
    np.testing.assert_allclose(np.asarray(xhat_z), np.asarray(ref_z), rtol=1e-3, atol=1e-4)

    # ---- check 3: exercise the lane-dense spatial tiling (TR < R) directly ----
    B3, H3, W3 = 2, 16, 128          # N = 2048 -> R = 16 rows of 128 lanes
    y3 = jax.random.normal(k3, (B3, H3, W3), jnp.float32)
    Fy3 = jnp.fft.fft2(y3)
    Fker3 = jnp.stack([psf2otf(k, (H3, W3)) for k in kers], axis=0)
    Fw3 = Fwv(dec2d_tmp, (H3, W3))
    Fw2_3 = (jnp.real(Fw3) ** 2 + jnp.imag(Fw3) ** 2).astype(jnp.float32)
    Fx3 = jax.block_until_ready(
        e_step_x_pallas(beta_bc, Fy3, Fker3, Fw2_3, Fz=None, max_rows=8))  # 2 row tiles
    S3 = jnp.einsum("bc,chw->bhw", beta_bc, Fw2_3)
    Fx3_ref = (jnp.conj(Fker3) * Fy3) / (jnp.abs(Fker3) ** 2 + S3)
    x3 = np.asarray(jnp.real(jnp.fft.ifft2(Fx3)))
    x3_ref = np.asarray(jnp.real(jnp.fft.ifft2(Fx3_ref)))
    np.testing.assert_allclose(x3, x3_ref, rtol=1e-3, atol=1e-4)

    print("KERNEL_OK")
</pallas_src>

<mosaic_0001>
module attributes {stable_mosaic.version = 11 : i64} {
  func.func @_e_step_x_kernel_noz(%arg0: i32, %arg1: i32, %arg2: memref<2x9xf32, #tpu.memory_space<smem>>, %arg3: memref<1x2x128xf32, #tpu.memory_space<vmem>>, %arg4: memref<1x2x128xf32, #tpu.memory_space<vmem>>, %arg5: memref<1x2x128xf32, #tpu.memory_space<vmem>>, %arg6: memref<1x2x128xf32, #tpu.memory_space<vmem>>, %arg7: memref<9x2x128xf32, #tpu.memory_space<vmem>>, %arg8: memref<1x2x2x128xf32, #tpu.memory_space<vmem>>) attributes {dimension_semantics = [#tpu.dimension_semantics<parallel>, #tpu.dimension_semantics<parallel>], iteration_bounds = array<i64: 1, 2>, scalar_prefetch = 1 : i64, scratch_operands = 0 : i64, tpu.core_type = #tpu.core_type<tc>, window_params = [{transform_indices = @transform_0, window_bounds = array<i64: 1, 2, 128>}, {transform_indices = @transform_1, window_bounds = array<i64: 1, 2, 128>}, {transform_indices = @transform_2, window_bounds = array<i64: 1, 2, 128>}, {transform_indices = @transform_3, window_bounds = array<i64: 1, 2, 128>}, {transform_indices = @transform_4, window_bounds = array<i64: 9, 2, 128>}, {transform_indices = @transform_5, window_bounds = array<i64: 1, 2, 2, 128>}]} {
    %c0 = arith.constant 0 : index
    %c0_0 = arith.constant 0 : index
    %c0_1 = arith.constant 0 : index
    %0 = vector.load %arg3[%c0, %c0_0, %c0_1] : memref<1x2x128xf32, #tpu.memory_space<vmem>>, vector<1x2x128xf32>
    %1 = vector.shape_cast %0 : vector<1x2x128xf32> to vector<2x128xf32>
    %c0_2 = arith.constant 0 : index
    %c0_3 = arith.constant 0 : index
    %c0_4 = arith.constant 0 : index
    %2 = vector.load %arg4[%c0_2, %c0_3, %c0_4] : memref<1x2x128xf32, #tpu.memory_space<vmem>>, vector<1x2x128xf32>
    %3 = vector.shape_cast %2 : vector<1x2x128xf32> to vector<2x128xf32>
    %c0_5 = arith.constant 0 : index
    %c0_6 = arith.constant 0 : index
    %c0_7 = arith.constant 0 : index
    %4 = vector.load %arg5[%c0_5, %c0_6, %c0_7] : memref<1x2x128xf32, #tpu.memory_space<vmem>>, vector<1x2x128xf32>
    %5 = vector.shape_cast %4 : vector<1x2x128xf32> to vector<2x128xf32>
    %c0_8 = arith.constant 0 : index
    %c0_9 = arith.constant 0 : index
    %c0_10 = arith.constant 0 : index
    %6 = vector.load %arg6[%c0_8, %c0_9, %c0_10] : memref<1x2x128xf32, #tpu.memory_space<vmem>>, vector<1x2x128xf32>
    %7 = vector.shape_cast %6 : vector<1x2x128xf32> to vector<2x128xf32>
    %8 = arith.index_cast %arg1 : i32 to index
    %c0_11 = arith.constant 0 : index
    %9 = memref.load %arg2[%8, %c0_11] : memref<2x9xf32, #tpu.memory_space<smem>>
    %c0_12 = arith.constant 0 : index
    %c0_13 = arith.constant 0 : index
    %c0_14 = arith.constant 0 : index
    %10 = vector.load %arg7[%c0_12, %c0_13, %c0_14] : memref<9x2x128xf32, #tpu.memory_space<vmem>>, vector<1x2x128xf32>
    %11 = vector.shape_cast %10 : vector<1x2x128xf32> to vector<2x128xf32>
    %12 = vector.broadcast %9 : f32 to vector<2x128xf32>
    %13 = arith.mulf %12, %11 : vector<2x128xf32>
    %14 = arith.index_cast %arg1 : i32 to index
    %c1 = arith.constant 1 : index
    %15 = memref.load %arg2[%14, %c1] : memref<2x9xf32, #tpu.memory_space<smem>>
    %c1_15 = arith.constant 1 : index
    %c0_16 = arith.constant 0 : index
    %c0_17 = arith.constant 0 : index
    %16 = vector.load %arg7[%c1_15, %c0_16, %c0_17] : memref<9x2x128xf32, #tpu.memory_space<vmem>>, vector<1x2x128xf32>
    %17 = vector.shape_cast %16 : vector<1x2x128xf32> to vector<2x128xf32>
    %18 = vector.broadcast %15 : f32 to vector<2x128xf32>
    %19 = arith.mulf %18, %17 : vector<2x128xf32>
    %20 = arith.addf %13, %19 : vector<2x128xf32>
    %21 = arith.index_cast %arg1 : i32 to index
    %c2 = arith.constant 2 : index
    %22 = memref.load %arg2[%21, %c2] : memref<2x9xf32, #tpu.memory_space<smem>>
    %c2_18 = arith.constant 2 : index
    %c0_19 = arith.constant 0 : index
    %c0_20 = arith.constant 0 : index
    %23 = vector.load %arg7[%c2_18, %c0_19, %c0_20] : memref<9x2x128xf32, #tpu.memory_space<vmem>>, vector<1x2x128xf32>
    %24 = vector.shape_cast %23 : vector<1x2x128xf32> to vector<2x128xf32>
    %25 = vector.broadcast %22 : f32 to vector<2x128xf32>
    %26 = arith.mulf %25, %24 : vector<2x128xf32>
    %27 = arith.addf %20, %26 : vector<2x128xf32>
    %28 = arith.index_cast %arg1 : i32 to index
    %c3 = arith.constant 3 : index
    %29 = memref.load %arg2[%28, %c3] : memref<2x9xf32, #tpu.memory_space<smem>>
    %c3_21 = arith.constant 3 : index
    %c0_22 = arith.constant 0 : index
    %c0_23 = arith.constant 0 : index
    %30 = vector.load %arg7[%c3_21, %c0_22, %c0_23] : memref<9x2x128xf32, #tpu.memory_space<vmem>>, vector<1x2x128xf32>
    %31 = vector.shape_cast %30 : vector<1x2x128xf32> to vector<2x128xf32>
    %32 = vector.broadcast %29 : f32 to vector<2x128xf32>
    %33 = arith.mulf %32, %31 : vector<2x128xf32>
    %34 = arith.addf %27, %33 : vector<2x128xf32>
    %35 = arith.index_cast %arg1 : i32 to index
    %c4 = arith.constant 4 : index
    %36 = memref.load %arg2[%35, %c4] : memref<2x9xf32, #tpu.memory_space<smem>>
    %c4_24 = arith.constant 4 : index
    %c0_25 = arith.constant 0 : index
    %c0_26 = arith.constant 0 : index
    %37 = vector.load %arg7[%c4_24, %c0_25, %c0_26] : memref<9x2x128xf32, #tpu.memory_space<vmem>>, vector<1x2x128xf32>
    %38 = vector.shape_cast %37 : vector<1x2x128xf32> to vector<2x128xf32>
    %39 = vector.broadcast %36 : f32 to vector<2x128xf32>
    %40 = arith.mulf %39, %38 : vector<2x128xf32>
    %41 = arith.addf %34, %40 : vector<2x128xf32>
    %42 = arith.index_cast %arg1 : i32 to index
    %c5 = arith.constant 5 : index
    %43 = memref.load %arg2[%42, %c5] : memref<2x9xf32, #tpu.memory_space<smem>>
    %c5_27 = arith.constant 5 : index
    %c0_28 = arith.constant 0 : index
    %c0_29 = arith.constant 0 : index
    %44 = vector.load %arg7[%c5_27, %c0_28, %c0_29] : memref<9x2x128xf32, #tpu.memory_space<vmem>>, vector<1x2x128xf32>
    %45 = vector.shape_cast %44 : vector<1x2x128xf32> to vector<2x128xf32>
    %46 = vector.broadcast %43 : f32 to vector<2x128xf32>
    %47 = arith.mulf %46, %45 : vector<2x128xf32>
    %48 = arith.addf %41, %47 : vector<2x128xf32>
    %49 = arith.index_cast %arg1 : i32 to index
    %c6 = arith.constant 6 : index
    %50 = memref.load %arg2[%49, %c6] : memref<2x9xf32, #tpu.memory_space<smem>>
    %c6_30 = arith.constant 6 : index
    %c0_31 = arith.constant 0 : index
    %c0_32 = arith.constant 0 : index
    %51 = vector.load %arg7[%c6_30, %c0_31, %c0_32] : memref<9x2x128xf32, #tpu.memory_space<vmem>>, vector<1x2x128xf32>
    %52 = vector.shape_cast %51 : vector<1x2x128xf32> to vector<2x128xf32>
    %53 = vector.broadcast %50 : f32 to vector<2x128xf32>
    %54 = arith.mulf %53, %52 : vector<2x128xf32>
    %55 = arith.addf %48, %54 : vector<2x128xf32>
    %56 = arith.index_cast %arg1 : i32 to index
    %c7 = arith.constant 7 : index
    %57 = memref.load %arg2[%56, %c7] : memref<2x9xf32, #tpu.memory_space<smem>>
    %c7_33 = arith.constant 7 : index
    %c0_34 = arith.constant 0 : index
    %c0_35 = arith.constant 0 : index
    %58 = vector.load %arg7[%c7_33, %c0_34, %c0_35] : memref<9x2x128xf32, #tpu.memory_space<vmem>>, vector<1x2x128xf32>
    %59 = vector.shape_cast %58 : vector<1x2x128xf32> to vector<2x128xf32>
    %60 = vector.broadcast %57 : f32 to vector<2x128xf32>
    %61 = arith.mulf %60, %59 : vector<2x128xf32>
    %62 = arith.addf %55, %61 : vector<2x128xf32>
    %63 = arith.index_cast %arg1 : i32 to index
    %c8 = arith.constant 8 : index
    %64 = memref.load %arg2[%63, %c8] : memref<2x9xf32, #tpu.memory_space<smem>>
    %c8_36 = arith.constant 8 : index
    %c0_37 = arith.constant 0 : index
    %c0_38 = arith.constant 0 : index
    %65 = vector.load %arg7[%c8_36, %c0_37, %c0_38] : memref<9x2x128xf32, #tpu.memory_space<vmem>>, vector<1x2x128xf32>
    %66 = vector.shape_cast %65 : vector<1x2x128xf32> to vector<2x128xf32>
    %67 = vector.broadcast %64 : f32 to vector<2x128xf32>
    %68 = arith.mulf %67, %66 : vector<2x128xf32>
    %69 = arith.addf %62, %68 : vector<2x128xf32>
    %70 = arith.mulf %5, %5 : vector<2x128xf32>
    %71 = arith.mulf %7, %7 : vector<2x128xf32>
    %72 = arith.addf %70, %71 : vector<2x128xf32>
    %73 = arith.addf %72, %69 : vector<2x128xf32>
    %74 = tpu.reciprocal %73 : vector<2x128xf32> -> vector<2x128xf32>
    %75 = arith.mulf %5, %1 : vector<2x128xf32>
    %76 = arith.mulf %7, %3 : vector<2x128xf32>
    %77 = arith.addf %75, %76 : vector<2x128xf32>
    %78 = arith.mulf %77, %74 : vector<2x128xf32>
    %c0_39 = arith.constant 0 : index
    %c0_40 = arith.constant 0 : index
    %c0_41 = arith.constant 0 : index
    %c0_42 = arith.constant 0 : index
    %79 = vector.load %arg8[%c0_39, %c0_40, %c0_41, %c0_42] : memref<1x2x2x128xf32, #tpu.memory_space<vmem>>, vector<1x1x2x128xf32>
    %80 = vector.shape_cast %79 : vector<1x1x2x128xf32> to vector<2x128xf32>
    %81 = vector.shape_cast %78 : vector<2x128xf32> to vector<1x1x2x128xf32>
    tpu.vector_store %arg8[%c0_39, %c0_40, %c0_41, %c0_42], %81 {strides = array<i32>} : memref<1x2x2x128xf32, #tpu.memory_space<vmem>>, vector<1x1x2x128xf32>,
    %82 = arith.mulf %5, %3 : vector<2x128xf32>
    %83 = arith.mulf %7, %1 : vector<2x128xf32>
    %84 = arith.subf %82, %83 : vector<2x128xf32>
    %85 = arith.mulf %84, %74 : vector<2x128xf32>
    %c0_43 = arith.constant 0 : index
    %c1_44 = arith.constant 1 : index
    %c0_45 = arith.constant 0 : index
    %c0_46 = arith.constant 0 : index
    %86 = vector.load %arg8[%c0_43, %c1_44, %c0_45, %c0_46] : memref<1x2x2x128xf32, #tpu.memory_space<vmem>>, vector<1x1x2x128xf32>
    %87 = vector.shape_cast %86 : vector<1x1x2x128xf32> to vector<2x128xf32>
    %88 = vector.shape_cast %85 : vector<2x128xf32> to vector<1x1x2x128xf32>
    tpu.vector_store %arg8[%c0_43, %c1_44, %c0_45, %c0_46], %88 {strides = array<i32>} : memref<1x2x2x128xf32, #tpu.memory_space<vmem>>, vector<1x1x2x128xf32>,
    return
  }
  func.func @transform_0(%arg0: i32, %arg1: i32, %arg2: memref<2x9xf32, #tpu.memory_space<smem>>) -> (i32, i32, i32) {
    %c0_i32 = arith.constant 0 : i32
    %c0_i32_0 = arith.constant 0 : i32
    return %arg1, %arg0, %c0_i32 : i32, i32, i32
  }
  func.func @transform_1(%arg0: i32, %arg1: i32, %arg2: memref<2x9xf32, #tpu.memory_space<smem>>) -> (i32, i32, i32) {
    %c0_i32 = arith.constant 0 : i32
    %c0_i32_0 = arith.constant 0 : i32
    return %arg1, %arg0, %c0_i32 : i32, i32, i32
  }
  func.func @transform_2(%arg0: i32, %arg1: i32, %arg2: memref<2x9xf32, #tpu.memory_space<smem>>) -> (i32, i32, i32) {
    %c0_i32 = arith.constant 0 : i32
    %c0_i32_0 = arith.constant 0 : i32
    return %arg1, %arg0, %c0_i32 : i32, i32, i32
  }
  func.func @transform_3(%arg0: i32, %arg1: i32, %arg2: memref<2x9xf32, #tpu.memory_space<smem>>) -> (i32, i32, i32) {
    %c0_i32 = arith.constant 0 : i32
    %c0_i32_0 = arith.constant 0 : i32
    return %arg1, %arg0, %c0_i32 : i32, i32, i32
  }
  func.func @transform_4(%arg0: i32, %arg1: i32, %arg2: memref<2x9xf32, #tpu.memory_space<smem>>) -> (i32, i32, i32) {
    %c0_i32 = arith.constant 0 : i32
    %c0_i32_0 = arith.constant 0 : i32
    %c0_i32_1 = arith.constant 0 : i32
    return %c0_i32, %arg0, %c0_i32_0 : i32, i32, i32
  }
  func.func @transform_5(%arg0: i32, %arg1: i32, %arg2: memref<2x9xf32, #tpu.memory_space<smem>>) -> (i32, i32, i32, i32) {
    %c0_i32 = arith.constant 0 : i32
    %c0_i32_0 = arith.constant 0 : i32
    %c0_i32_1 = arith.constant 0 : i32
    return %arg1, %c0_i32, %arg0, %c0_i32_0 : i32, i32, i32, i32
  }
}

</mosaic_0001>

<llo_original>
// kernel: tpu_custom_call.1
$region0: #{tpu_custom_call.1}
  #allocation0 [shape = 'u32[]', space=smem, size = 0x4, offset = 0x4, fixed_abs, tag = 'smem constant byte address 0x4 - core index']
  #allocation1 [shape = 'u32[72,128]{1,0:T(1,128)}', space=vmem, size = 0x9000, scoped, tag = 'internal scratch']
  #allocation2 [shape = 's32[1]{0}', space=sflag, size = 0x4, scoped, tag = 'scoped memory for tpu_custom_call.1']
  #allocation3 [shape = 'u8[1024]{0}', space=smem, size = 0x400, scoped, tag = 'prefetched SMEM operand 0']
  %s0 = inlined_call_operand.hbm [shape: f32[2,9], index: 0, kind: input, shape index: {}]
  %s1 = inlined_call_operand.hbm [shape: f32[2,2,128], index: 1, kind: input, shape index: {}]
  %s2 = inlined_call_operand.hbm [shape: f32[2,2,128], index: 2, kind: input, shape index: {}]
  %s3 = inlined_call_operand.hbm [shape: f32[2,2,128], index: 3, kind: input, shape index: {}]
  %s4 = inlined_call_operand.hbm [shape: f32[2,2,128], index: 4, kind: input, shape index: {}]
  %s5 = inlined_call_operand.hbm [shape: f32[9,2,128], index: 5, kind: input, shape index: {}]
  %s6 = inlined_call_operand.hbm [shape: f32[2,2,2,128], index: 6, kind: output, shape index: {}]
  %s7 = sld [smem:[#allocation0]]
  $region73: #{tpu_custom_call.1} parent=0
    _
  %s9 = ssub.s32 1, %s7
  %s10 = scalar_select 0, %s9, %s7
  %s12 = sshll.u32 %s0, 4
  %s13 = int_to_ptr.hbm [resolvable:$true] %s12
  %15 = dma.hbm_to_smem %s13, 32, [#allocation3], [#allocation2]
  %17 = dma.done [#allocation2], 32
  %18 = sfence
  $region1: #{tpu_custom_call.1} parent=0
    #allocation4 [shape = 'u8[2048]{0}', space=vmem, size = 0x800, scoped, tag = 'input window, operand 1']
    #allocation5 [shape = 's32[2]{0}', space=sflag, size = 0x8, scoped, tag = 'scoped memory for tpu_custom_call.1']
    #allocation6 [shape = 's32[2]{0}', space=sflag, size = 0x8, scoped, tag = 'scoped memory for tpu_custom_call.1']
    #allocation7 [shape = 'u8[2048]{0}', space=vmem, size = 0x800, scoped, tag = 'input window, operand 2']
    #allocation8 [shape = 's32[2]{0}', space=sflag, size = 0x8, scoped, tag = 'scoped memory for tpu_custom_call.1']
    #allocation9 [shape = 'u8[2048]{0}', space=vmem, size = 0x800, scoped, tag = 'input window, operand 3']
    #allocation10 [shape = 'u8[2048]{0}', space=vmem, size = 0x800, scoped, tag = 'input window, operand 4']
    #allocation11 [shape = 's32[2]{0}', space=sflag, size = 0x8, scoped, tag = 'scoped memory for tpu_custom_call.1']
    #allocation12 [shape = 'u8[9216]{0}', space=vmem, size = 0x2400, scoped, tag = 'input window, operand 5, single buffered']
    #allocation13 [shape = 'u8[4096]{0}', space=vmem, size = 0x1000, scoped, tag = 'output window, operand 0']
    %19 = vsyncpa [#allocation5], 0
    %s20 = scalar_lea.sflag [#allocation5], 1
    %21 = vsyncpa %s20, 0
    %22 = vsyncpa [#allocation8], 0
    %s23 = scalar_lea.sflag [#allocation8], 1
    %24 = vsyncpa %s23, 0
    %25 = vsyncpa [#allocation11], 0
    %s26 = scalar_lea.sflag [#allocation11], 1
    %27 = vsyncpa %s26, 0
    %28 = vsyncpa [#allocation6], 0
    %s29 = scalar_lea.sflag [#allocation6], 1
    %30 = vsyncpa %s29, 0
    loop: start=0, step=1, limit=4
    $region2: #{tpu_custom_call.1} parent=1 // loop_pre_header
      _
    $region3: #{tpu_custom_call.1} parent=1 // loop_header
      %s32 = sphi 0, %s36
      %p33 = scmp.ge.s32.totalorder %s32, 4
      %s39 = sphi 0, %s51
      %s40 = sphi 0, %s47
      %s41 = sphi 0, %s39
      %s42 = sphi 0, %s40
      %s43 = sphi 0, %s41
      %s44 = sphi 0, %s42
      %s56 = sphi 0, %s58
      %s59 = sphi 0, %s56
      %s60 = sphi 0, %s59
      %s76 = sphi 0, %s60
      %s84 = sphi 0, %s86
      %s87 = sphi 0, %s84
      %s88 = sphi 0, %s87
      %s104 = sphi 0, %s88
      %s112 = sphi 0, %s114
      %s115 = sphi 0, %s112
      %s116 = sphi 0, %s115
      %s132 = sphi 0, %s116
      %s140 = sphi 0, %s142
      %s143 = sphi 0, %s140
      %s144 = sphi 0, %s143
      %s160 = sphi 0, %s144
      %s166 = sphi 0, %s168
      %s169 = sphi 0, %s166
      %s170 = sphi 0, %s169
      %s186 = sphi 0, %s170
      %s194 = sphi 0, %s196
      %s197 = sphi 0, %s194
      %s198 = sphi 0, %s197
      %s214 = sphi 0, %s198
    $region4: #{tpu_custom_call.1} parent=1 // loop_header_branch
      %35 = sbr.rel (%p33) target = $region8
    $region5: #{tpu_custom_call.1} parent=1 // loop_body
      %s37 = ssub.s32 %s32, 1
      %s38 = ssub.s32 %s32, 2
      %s45 = sadd.s32 1, %s40
      %p46 = scmp.ge.s32.totalorder %s45, 2
      %s47 = scalar_select %p46, 0, %s45
      %s48 = sadd.s32 1, %s39
      %s49 = scalar_select %p46, %s48, %s39
      %p50 = scmp.ge.s32.totalorder %s49, 1
      %s51 = scalar_select %p50, 0, %s49
      %s52 = ssub.s32 %s40, %s47
      %s53 = ssub.s32 %s39, %s51
      %s54 = sor.u32 %s52, %s53
      %p55 = scmp.eq.s32.totalorder %s54, 0
      %s57 = sadd.s32 %s56, 1
      %s58 = scalar_select %p55, %s56, %s57
      %p61 = pneg %p55
      %p62 = scmp.eq.s32.totalorder %s32, 1
      %p63 = por %p61, %p62
      %p64 = scmp.ne.s32.totalorder %s56, %s59
      %p65 = scmp.eq.s32.totalorder %s32, 0
      %p66 = por %p64, %p65
      %p67 = scmp.ne.s32.totalorder %s56, %s59
      %p68 = scmp.eq.s32.totalorder %s37, 1
      %p69 = por %p67, %p68
      %p70 = scmp.ne.s32.totalorder %s59, %s60
      %p71 = scmp.eq.s32.totalorder %s37, 0
      %p72 = por %p70, %p71
      %p73 = scmp.ne.s32.totalorder %s59, %s60
      %p74 = scmp.eq.s32.totalorder %s38, 1
      %p75 = por %p73, %p74
      %p77 = scmp.ne.s32.totalorder %s60, %s76
      %p78 = scmp.eq.s32.totalorder %s38, 0
      %p79 = por %p77, %p78
      %s80 = ssub.s32 %s40, %s47
      %s81 = ssub.s32 %s39, %s51
      %s82 = sor.u32 %s80, %s81
      %p83 = scmp.eq.s32.totalorder %s82, 0
      %s85 = sadd.s32 %s84, 1
      %s86 = scalar_select %p83, %s84, %s85
      %p89 = pneg %p83
      %p90 = scmp.eq.s32.totalorder %s32, 1
      %p91 = por %p89, %p90
      %p92 = scmp.ne.s32.totalorder %s84, %s87
      %p93 = scmp.eq.s32.totalorder %s32, 0
      %p94 = por %p92, %p93
      %p95 = scmp.ne.s32.totalorder %s84, %s87
      %p96 = scmp.eq.s32.totalorder %s37, 1
      %p97 = por %p95, %p96
      %p98 = scmp.ne.s32.totalorder %s87, %s88
      %p99 = scmp.eq.s32.totalorder %s37, 0
      %p100 = por %p98, %p99
      %p101 = scmp.ne.s32.totalorder %s87, %s88
      %p102 = scmp.eq.s32.totalorder %s38, 1
      %p103 = por %p101, %p102
      %p105 = scmp.ne.s32.totalorder %s88, %s104
      %p106 = scmp.eq.s32.totalorder %s38, 0
      %p107 = por %p105, %p106
      %s108 = ssub.s32 %s40, %s47
      %s109 = ssub.s32 %s39, %s51
      %s110 = sor.u32 %s108, %s109
      %p111 = scmp.eq.s32.totalorder %s110, 0
      %s113 = sadd.s32 %s112, 1
      %s114 = scalar_select %p111, %s112, %s113
      %p117 = pneg %p111
      %p118 = scmp.eq.s32.totalorder %s32, 1
      %p119 = por %p117, %p118
      %p120 = scmp.ne.s32.totalorder %s112, %s115
      %p121 = scmp.eq.s32.totalorder %s32, 0
      %p122 = por %p120, %p121
      %p123 = scmp.ne.s32.totalorder %s112, %s115
      %p124 = scmp.eq.s32.totalorder %s37, 1
      %p125 = por %p123, %p124
      %p126 = scmp.ne.s32.totalorder %s115, %s116
      %p127 = scmp.eq.s32.totalorder %s37, 0
      %p128 = por %p126, %p127
      %p129 = scmp.ne.s32.totalorder %s115, %s116
      %p130 = scmp.eq.s32.totalorder %s38, 1
      %p131 = por %p129, %p130
      %p133 = scmp.ne.s32.totalorder %s116, %s132
      %p134 = scmp.eq.s32.totalorder %s38, 0
      %p135 = por %p133, %p134
      %s136 = ssub.s32 %s40, %s47
      %s137 = ssub.s32 %s39, %s51
      %s138 = sor.u32 %s136, %s137
      %p139 = scmp.eq.s32.totalorder %s138, 0
      %s141 = sadd.s32 %s140, 1
      %s142 = scalar_select %p139, %s140, %s141
      %p145 = pneg %p139
      %p146 = scmp.eq.s32.totalorder %s32, 1
      %p147 = por %p145, %p146
      %p148 = scmp.ne.s32.totalorder %s140, %s143
      %p149 = scmp.eq.s32.totalorder %s32, 0
      %p150 = por %p148, %p149
      %p151 = scmp.ne.s32.totalorder %s140, %s143
      %p152 = scmp.eq.s32.totalorder %s37, 1
      %p153 = por %p151, %p152
      %p154 = scmp.ne.s32.totalorder %s143, %s144
      %p155 = scmp.eq.s32.totalorder %s37, 0
      %p156 = por %p154, %p155
      %p157 = scmp.ne.s32.totalorder %s143, %s144
      %p158 = scmp.eq.s32.totalorder %s38, 1
      %p159 = por %p157, %p158
      %p161 = scmp.ne.s32.totalorder %s144, %s160
      %p162 = scmp.eq.s32.totalorder %s38, 0
      %p163 = por %p161, %p162
      %s164 = ssub.s32 %s39, %s51
      %p165 = scmp.eq.s32.totalorder %s164, 0
      %s167 = sadd.s32 %s166, 1
      %s168 = scalar_select %p165, %s166, %s167
      %p171 = pneg %p165
      %p172 = scmp.eq.s32.totalorder %s32, 1
      %p173 = por %p171, %p172
      %p174 = scmp.ne.s32.totalorder %s166, %s169
      %p175 = scmp.eq.s32.totalorder %s32, 0
      %p176 = por %p174, %p175
      %p177 = scmp.ne.s32.totalorder %s166, %s169
      %p178 = scmp.eq.s32.totalorder %s37, 1
      %p179 = por %p177, %p178
      %p180 = scmp.ne.s32.totalorder %s169, %s170
      %p181 = scmp.eq.s32.totalorder %s37, 0
      %p182 = por %p180, %p181
      %p183 = scmp.ne.s32.totalorder %s169, %s170
      %p184 = scmp.eq.s32.totalorder %s38, 1
      %p185 = por %p183, %p184
      %p187 = scmp.ne.s32.totalorder %s170, %s186
      %p188 = scmp.eq.s32.totalorder %s38, 0
      %p189 = por %p187, %p188
      %s190 = ssub.s32 %s40, %s47
      %s191 = ssub.s32 %s39, %s51
      %s192 = sor.u32 %s190, %s191
      %p193 = scmp.eq.s32.totalorder %s192, 0
      %s195 = sadd.s32 %s194, 1
      %s196 = scalar_select %p193, %s194, %s195
      %p199 = pneg %p193
      %p200 = scmp.eq.s32.totalorder %s32, 1
      %p201 = por %p199, %p200
      %p202 = scmp.ne.s32.totalorder %s194, %s197
      %p203 = scmp.eq.s32.totalorder %s32, 0
      %p204 = por %p202, %p203
      %p205 = scmp.ne.s32.totalorder %s194, %s197
      %p206 = scmp.eq.s32.totalorder %s37, 1
      %p207 = por %p205, %p206
      %p208 = scmp.ne.s32.totalorder %s197, %s198
      %p209 = scmp.eq.s32.totalorder %s37, 0
      %p210 = por %p208, %p209
      %p211 = scmp.ne.s32.totalorder %s197, %s198
      %p212 = scmp.eq.s32.totalorder %s38, 1
      %p213 = por %p211, %p212
      %p215 = scmp.ne.s32.totalorder %s198, %s214
      %p216 = scmp.eq.s32.totalorder %s38, 0
      %p217 = por %p215, %p216
      %p218 = scmp.le.s32.totalorder 1, %s32
      %p219 = scmp.lt.s32.totalorder %s32, 3
      %p220 = pnand %p218, %p219
      %p221 = pneg %p220
      // Predicated region
      $region9: #{tpu_custom_call.1} parent=5 // pred_check
        _
      $region10: #{tpu_custom_call.1} parent=5 // pred_check_branch
        %223 = sbr.rel (%p220) target = $region12
      $region11: #{tpu_custom_call.1} parent=5 // pred_region
        %s224 = ssub.s32 %s32, 1
        // Predicated region
        $region13: #{tpu_custom_call.1} parent=11 // pred_check
          %p225 = pneg %p182
        $region14: #{tpu_custom_call.1} parent=11 // pred_check_branch
          %227 = sbr.rel (%p225) target = $region16
        $region15: #{tpu_custom_call.1} parent=11 // pred_region
          %229 = vsyncadd [#allocation11], 0
          %s230 = smul.addr %s41, 2
          %s231 = scalar_lea.hbm %s5, %s230
          %s232 = sshll.u32 %s231, 4
          %s233 = int_to_ptr.hbm [resolvable:$true] %s232
          %s234 = sshll.u32 [#allocation12], 4
          %s235 = int_to_ptr.vmem [resolvable:$true] %s234
          %240 = dma.hbm_to_vmem [thread:$0]  %s233, 288, %s235, [#allocation11], 32, 32, 2
        $region16: #{tpu_custom_call.1} parent=11 // pred_fallthru
          _
      $region12: #{tpu_custom_call.1} parent=5 // pred_fallthru
        _
      %p241 = scmp.lt.s32.totalorder %s32, 2
      // Predicated region
      $region17: #{tpu_custom_call.1} parent=5 // pred_check
        %p242 = pneg %p241
      $region18: #{tpu_custom_call.1} parent=5 // pred_check_branch
        %244 = sbr.rel (%p242) target = $region20
      $region19: #{tpu_custom_call.1} parent=5 // pred_region
        // Predicated region
        $region21: #{tpu_custom_call.1} parent=19 // pred_check
          %p245 = pneg %p66
        $region22: #{tpu_custom_call.1} parent=19 // pred_check_branch
          %247 = sbr.rel (%p245) target = $region24
        $region23: #{tpu_custom_call.1} parent=19 // pred_region
          %s248 = sand.u32 %s56, 1
          %s249 = scalar_lea.sflag [#allocation5], %s248
          %s250 = sand.u32 %s56, 1
          %s251 = smul.addr %s250, 2
          %s252 = scalar_lea.vmem [#allocation4], %s251
          %254 = vsyncadd %s249, 0
          %s255 = sadd.s32 %s39, %s40
          %s256 = smul.addr %s255, 2
          %s257 = scalar_lea.hbm %s1, %s256
          %s259 = sshll.u32 %s257, 4
          %s260 = int_to_ptr.hbm [resolvable:$true] %s259
          %s261 = sshll.u32 %s252, 4
          %s262 = int_to_ptr.vmem [resolvable:$true] %s261
          %264 = dma.hbm_to_vmem [thread:$0]  %s260, 32, %s262, %s249
        $region24: #{tpu_custom_call.1} parent=19 // pred_fallthru
          _
        // Predicated region
        $region25: #{tpu_custom_call.1} parent=19 // pred_check
          %p265 = pneg %p94
        $region26: #{tpu_custom_call.1} parent=19 // pred_check_branch
          %267 = sbr.rel (%p265) target = $region28
        $region27: #{tpu_custom_call.1} parent=19 // pred_region
          %s268 = sand.u32 %s32, 1
          %s269 = scalar_lea.sflag [#allocation8], %s268
          %s270 = sand.u32 %s84, 1
          %s271 = smul.addr %s270, 2
          %s272 = scalar_lea.vmem [#allocation7], %s271
          %274 = vsyncadd %s269, 0
          %s275 = sadd.s32 %s39, %s40
          %s276 = smul.addr %s275, 2
          %s277 = scalar_lea.hbm %s2, %s276
          %s279 = sshll.u32 %s277, 4
          %s280 = int_to_ptr.hbm [resolvable:$true] %s279
          %s281 = sshll.u32 %s272, 4
          %s282 = int_to_ptr.vmem [resolvable:$true] %s281
          %284 = dma.hbm_to_vmem [thread:$0]  %s280, 32, %s282, %s269
        $region28: #{tpu_custom_call.1} parent=19 // pred_fallthru
          _
        // Predicated region
        $region29: #{tpu_custom_call.1} parent=19 // pred_check
          %p285 = pneg %p122
        $region30: #{tpu_custom_call.1} parent=19 // pred_check_branch
          %287 = sbr.rel (%p285) target = $region32
        $region31: #{tpu_custom_call.1} parent=19 // pred_region
          %s288 = sand.u32 %s32, 1
          %s289 = scalar_lea.sflag [#allocation8], %s288
          %s290 = sand.u32 %s112, 1
          %s291 = smul.addr %s290, 2
          %s292 = scalar_lea.vmem [#allocation9], %s291
          %294 = vsyncadd %s289, 0
          %s295 = sadd.s32 %s39, %s40
          %s296 = smul.addr %s295, 2
          %s297 = scalar_lea.hbm %s3, %s296
          %s299 = sshll.u32 %s297, 4
          %s300 = int_to_ptr.hbm [resolvable:$true] %s299
          %s301 = sshll.u32 %s292, 4
          %s302 = int_to_ptr.vmem [resolvable:$true] %s301
          %304 = dma.hbm_to_vmem [thread:$0]  %s300, 32, %s302, %s289
        $region32: #{tpu_custom_call.1} parent=19 // pred_fallthru
          _
        // Predicated region
        $region33: #{tpu_custom_call.1} parent=19 // pred_check
          %p305 = pneg %p150
        $region34: #{tpu_custom_call.1} parent=19 // pred_check_branch
          %307 = sbr.rel (%p305) target = $region36
        $region35: #{tpu_custom_call.1} parent=19 // pred_region
          %s308 = sand.u32 %s32, 1
          %s309 = scalar_lea.sflag [#allocation11], %s308
          %s310 = sand.u32 %s140, 1
          %s311 = smul.addr %s310, 2
          %s312 = scalar_lea.vmem [#allocation10], %s311
          %314 = vsyncadd %s309, 0
          %s315 = sadd.s32 %s39, %s40
          %s316 = smul.addr %s315, 2
          %s317 = scalar_lea.hbm %s4, %s316
          %s319 = sshll.u32 %s317, 4
          %s320 = int_to_ptr.hbm [resolvable:$true] %s319
          %s321 = sshll.u32 %s312, 4
          %s322 = int_to_ptr.vmem [resolvable:$true] %s321
          %324 = dma.hbm_to_vmem [thread:$0]  %s320, 32, %s322, %s309
        $region36: #{tpu_custom_call.1} parent=19 // pred_fallthru
          _
      $region20: #{tpu_custom_call.1} parent=5 // pred_fallthru
        _
      %p325 = scmp.le.s32.totalorder 1, %s32
      %p326 = scmp.lt.s32.totalorder %s32, 3
      %p327 = pnand %p325, %p326
      %p328 = pneg %p327
      // Predicated region
      $region37: #{tpu_custom_call.1} parent=5 // pred_check
        _
      $region38: #{tpu_custom_call.1} parent=5 // pred_check_branch
        %330 = sbr.rel (%p327) target = $region40
      $region39: #{tpu_custom_call.1} parent=5 // pred_region
        %s331 = ssub.s32 %s32, 1
        %s332 = sand.u32 %s59, 1
        %s333 = scalar_lea.sflag [#allocation5], %s332
        %s334 = sand.u32 %s59, 1
        %s335 = smul.addr %s334, 2
        %s336 = scalar_lea.vmem [#allocation4], %s335
        // Predicated region
        $region41: #{tpu_custom_call.1} parent=39 // pred_check
          %p337 = pneg %p72
        $region42: #{tpu_custom_call.1} parent=39 // pred_check_branch
          %339 = sbr.rel (%p337) target = $region44
        $region43: #{tpu_custom_call.1} parent=39 // pred_region
          %341 = dma.done %s333, 32
        $region44: #{tpu_custom_call.1} parent=39 // pred_fallthru
          _
        %s342 = sand.u32 %s37, 1
        %s343 = scalar_lea.sflag [#allocation8], %s342
        %s344 = sand.u32 %s87, 1
        %s345 = smul.addr %s344, 2
        %s346 = scalar_lea.vmem [#allocation7], %s345
        // Predicated region
        $region45: #{tpu_custom_call.1} parent=39 // pred_check
          %p347 = pneg %p100
        $region46: #{tpu_custom_call.1} parent=39 // pred_check_branch
          %349 = sbr.rel (%p347) target = $region48
        $region47: #{tpu_custom_call.1} parent=39 // pred_region
          %351 = dma.done %s343, 32
        $region48: #{tpu_custom_call.1} parent=39 // pred_fallthru
          _
        %s352 = sand.u32 %s37, 1
        %s353 = scalar_lea.sflag [#allocation8], %s352
        %s354 = sand.u32 %s115, 1
        %s355 = smul.addr %s354, 2
        %s356 = scalar_lea.vmem [#allocation9], %s355
        // Predicated region
        $region49: #{tpu_custom_call.1} parent=39 // pred_check
          %p357 = pneg %p128
        $region50: #{tpu_custom_call.1} parent=39 // pred_check_branch
          %359 = sbr.rel (%p357) target = $region52
        $region51: #{tpu_custom_call.1} parent=39 // pred_region
          %361 = dma.done %s353, 32
        $region52: #{tpu_custom_call.1} parent=39 // pred_fallthru
          _
        %s362 = sand.u32 %s37, 1
        %s363 = scalar_lea.sflag [#allocation11], %s362
        %s364 = sand.u32 %s143, 1
        %s365 = smul.addr %s364, 2
        %s366 = scalar_lea.vmem [#allocation10], %s365
        // Predicated region
        $region53: #{tpu_custom_call.1} parent=39 // pred_check
          %p367 = pneg %p156
        $region54: #{tpu_custom_call.1} parent=39 // pred_check_branch
          %369 = sbr.rel (%p367) target = $region56
        $region55: #{tpu_custom_call.1} parent=39 // pred_region
          %371 = dma.done %s363, 32
        $region56: #{tpu_custom_call.1} parent=39 // pred_fallthru
          _
        // Predicated region
        $region57: #{tpu_custom_call.1} parent=39 // pred_check
          %p372 = pneg %p182
        $region58: #{tpu_custom_call.1} parent=39 // pred_check_branch
          %374 = sbr.rel (%p372) target = $region60
        $region59: #{tpu_custom_call.1} parent=39 // pred_region
          %376 = dma.done [#allocation11], 288
        $region60: #{tpu_custom_call.1} parent=39 // pred_fallthru
          _
        %s377 = sand.u32 %s59, 1
        %s378 = scalar_lea.sflag [#allocation5], %s377
        %s379 = sand.u32 %s59, 1
        %s380 = smul.addr %s379, 2
        %s381 = scalar_lea.vmem [#allocation4], %s380
        %p382 = pneg %p72
        %p383 = pneg %p69
        %s384 = sand.u32 %s37, 1
        %s385 = scalar_lea.sflag [#allocation8], %s384
        %s386 = sand.u32 %s87, 1
        %s387 = smul.addr %s386, 2
        %s388 = scalar_lea.vmem [#allocation7], %s387
        %p389 = pneg %p100
        %p390 = pneg %p97
        %s391 = sand.u32 %s37, 1
        %s392 = scalar_lea.sflag [#allocation8], %s391
        %s393 = sand.u32 %s115, 1
        %s394 = smul.addr %s393, 2
        %s395 = scalar_lea.vmem [#allocation9], %s394
        %p396 = pneg %p128
        %p397 = pneg %p125
        %s398 = sand.u32 %s37, 1
        %s399 = scalar_lea.sflag [#allocation11], %s398
        %s400 = sand.u32 %s143, 1
        %s401 = smul.addr %s400, 2
        %s402 = scalar_lea.vmem [#allocation10], %s401
        %p403 = pneg %p156
        %p404 = pneg %p153
        %p405 = pneg %p182
        %p406 = pneg %p179
        %p407 = pneg %p210
        %p408 = pneg %p207
        %s409 = sand.u32 %s197, 1
        %s410 = scalar_lea.sflag [#allocation6], %s409
        %s411 = sand.u32 %s197, 1
        %s412 = smul.addr %s411, 4
        %s413 = scalar_lea.vmem [#allocation13], %s412
        %v414 = vld [vmem:[%s336] sm:$0x3]
        %v415 = vld [vmem:[%s346] sm:$0x3]
        %v416 = vld [vmem:[%s356] sm:$0x3]
        %v417 = vld [vmem:[%s366] sm:$0x3]
        %s418 = smul.u32 %s42, 128
        %s419 = sld [smem:[#allocation3 + %s418]]
        %v420 = vld [vmem:[#allocation12] sm:$0x3]
        %v421 = vstv %s419
        %v422 = vmul.f32 %v421, %v420
        %s423 = sadd.s32 %s418, 1
        %s424 = sld [smem:[#allocation3 + %s423]]
        %s425 = scalar_lea.vmem [#allocation12], 2
        %v426 = vld [vmem:[%s425] sm:$0x3]
        %v427 = vstv %s424
        %v428 = vmul.f32 %v427, %v426
        %v429 = vadd.f32 %v422, %v428
        %s430 = sadd.s32 %s418, 2
        %s431 = sld [smem:[#allocation3 + %s430]]
        %s432 = scalar_lea.vmem [#allocation12], 4
        %v433 = vld [vmem:[%s432] sm:$0x3]
        %v434 = vstv %s431
        %v435 = vmul.f32 %v434, %v433
        %v436 = vadd.f32 %v429, %v435
        %s437 = sadd.s32 %s418, 3
        %s438 = sld [smem:[#allocation3 + %s437]]
        %s439 = scalar_lea.vmem [#allocation12], 6
        %v440 = vld [vmem:[%s439] sm:$0x3]
        %v441 = vstv %s438
        %v442 = vmul.f32 %v441, %v440
        %v443 = vadd.f32 %v436, %v442
        %s444 = sadd.s32 %s418, 4
        %s445 = sld [smem:[#allocation3 + %s444]]
        %s446 = scalar_lea.vmem [#allocation12], 8
        %v447 = vld [vmem:[%s446] sm:$0x3]
        %v448 = vstv %s445
        %v449 = vmul.f32 %v448, %v447
        %v450 = vadd.f32 %v443, %v449
        %s451 = sadd.s32 %s418, 5
        %s452 = sld [smem:[#allocation3 + %s451]]
        %s453 = scalar_lea.vmem [#allocation12], 10
        %v454 = vld [vmem:[%s453] sm:$0x3]
        %v455 = vstv %s452
        %v456 = vmul.f32 %v455, %v454
        %v457 = vadd.f32 %v450, %v456
        %s458 = sadd.s32 %s418, 6
        %s459 = sld [smem:[#allocation3 + %s458]]
        %s460 = scalar_lea.vmem [#allocation12], 12
        %v461 = vld [vmem:[%s460] sm:$0x3]
        %v462 = vstv %s459
        %v463 = vmul.f32 %v462, %v461
        %v464 = vadd.f32 %v457, %v463
        %s465 = sadd.s32 %s418, 7
        %s466 = sld [smem:[#allocation3 + %s465]]
        %s467 = scalar_lea.vmem [#allocation12], 14
        %v468 = vld [vmem:[%s467] sm:$0x3]
        %v469 = vstv %s466
        %v470 = vmul.f32 %v469, %v468
        %v471 = vadd.f32 %v464, %v470
        %s472 = sadd.s32 %s418, 8
        %s473 = sld [smem:[#allocation3 + %s472]]
        %s474 = scalar_lea.vmem [#allocation12], 16
        %v475 = vld [vmem:[%s474] sm:$0x3]
        %v476 = vstv %s473
        %v477 = vmul.f32 %v476, %v475
        %v478 = vadd.f32 %v471, %v477
        %v479 = vmul.f32 %v416, %v416
        %v480 = vmul.f32 %v417, %v417
        %v481 = vadd.f32 %v479, %v480
        %v482 = vadd.f32 %v481, %v478
        %v483 = vrcp.pop %v482
        %v484 = vmul.f32 %v482, %v483
        %v485 = vsub.f32 1.0, %v484
        %v486 = vmul.f32 %v483, %v485
        %v487 = vadd.f32 %v483, %v486
        %vm488 = vweird.f32 %v482
        %vm489 = vweird.f32 %v483
        %vm490 = vmor %vm488, %vm489
        %v491 = vsel %vm490, %v483, %v487
        %v492 = vand.u32 2147483647, %v482
        %vm493 = vcmp.eq.f32.partialorder %v492, 8.507059e+37
        %v494 = vand.u32 %v482, 2147483648
        %v495 = vor.u32 1.1754944e-38, %v494
        %v496 = vsel %vm493, %v495, %v491
        %v497 = vmul.f32 %v416, %v414
        %v498 = vmul.f32 %v417, %v415
        %v499 = vadd.f32 %v497, %v498
        %v500 = vmul.f32 %v499, %v496
        %501 = vst [vmem:[%s413] sm:$0x3] %v500
        %v502 = vmul.f32 %v416, %v415
        %v503 = vmul.f32 %v417, %v414
        %v504 = vsub.f32 %v502, %v503
        %v505 = vmul.f32 %v504, %v496
        %s506 = scalar_lea.vmem %s413, 2 [#allocation13]
        %507 = vst [vmem:[%s506] sm:$0x3] %v505
        %s508 = sand.u32 %s197, 1
        %s509 = scalar_lea.sflag [#allocation6], %s508
        %s510 = sand.u32 %s197, 1
        %s511 = smul.addr %s510, 4
        %s512 = scalar_lea.vmem [#allocation13], %s511
        // Predicated region
        $region61: #{tpu_custom_call.1} parent=39 // pred_check
          %p513 = pneg %p207
        $region62: #{tpu_custom_call.1} parent=39 // pred_check_branch
          %515 = sbr.rel (%p513) target = $region64
        $region63: #{tpu_custom_call.1} parent=39 // pred_region
          %517 = vsyncadd %s509, 0
          %s518 = smul.addr %s42, 2
          %s519 = sadd.s32 %s41, %s518
          %s520 = smul.addr %s519, 2
          %s521 = scalar_lea.hbm %s6, %s520
          %s522 = sshll.u32 %s512, 4
          %s523 = int_to_ptr.vmem [resolvable:$true] %s522
          %s524 = sshll.u32 %s521, 4
          %s525 = int_to_ptr.hbm [resolvable:$true] %s524
          %530 = dma.vmem_to_hbm [thread:$0]  %s523, 64, %s525, %s509, 32, 32, 2
        $region64: #{tpu_custom_call.1} parent=39 // pred_fallthru
          _
      $region40: #{tpu_custom_call.1} parent=5 // pred_fallthru
        _
      %p531 = scmp.le.s32.totalorder 2, %s32
      // Predicated region
      $region65: #{tpu_custom_call.1} parent=5 // pred_check
        %p532 = pneg %p531
      $region66: #{tpu_custom_call.1} parent=5 // pred_check_branch
        %534 = sbr.rel (%p532) target = $region68
      $region67: #{tpu_custom_call.1} parent=5 // pred_region
        %s535 = ssub.s32 %s32, 2
        // Predicated region
        $region69: #{tpu_custom_call.1} parent=67 // pred_check
          %p536 = pneg %p213
        $region70: #{tpu_custom_call.1} parent=67 // pred_check_branch
          %538 = sbr.rel (%p536) target = $region72
        $region71: #{tpu_custom_call.1} parent=67 // pred_region
          %s539 = sand.u32 %s198, 1
          %s540 = scalar_lea.sflag [#allocation6], %s539
          %s541 = sand.u32 %s198, 1
          %s542 = smul.addr %s541, 4
          %s543 = scalar_lea.vmem [#allocation13], %s542
          %545 = dma.done %s540, 64
        $region72: #{tpu_custom_call.1} parent=67 // pred_fallthru
          _
      $region68: #{tpu_custom_call.1} parent=5 // pred_fallthru
        _
    $region6: #{tpu_custom_call.1} parent=1 // loop_footer
      %s36 = sadd.s32 1, %s32
    $region7: #{tpu_custom_call.1} parent=1 // loop_footer_branch
      %31 = sbr.rel target = $region3
    $region8: #{tpu_custom_call.1} parent=1 // loop_exit
      _
    %546 = vsyncpa [#allocation5], 1
    %s547 = scalar_lea.sflag [#allocation5], 1
    %548 = vsyncpa %s547, 1
    %549 = vsyncpa [#allocation8], 1
    %s550 = scalar_lea.sflag [#allocation8], 1
    %551 = vsyncpa %s550, 1
    %552 = vsyncpa [#allocation11], 1
    %s553 = scalar_lea.sflag [#allocation11], 1
    %554 = vsyncpa %s553, 1
    %555 = vsyncpa [#allocation6], 1
    %s556 = scalar_lea.sflag [#allocation6], 1
    %557 = vsyncpa %s556, 1

</llo_original>
